<compile_context>
chip_gen: v5e
topology: v5e:2x2
jax: 0.10.0
libtpu: 0.0.40
codegen_flags: <defaults>
</compile_context>

<pallas_src>
import jax
import jax.numpy as jnp
from jax.experimental import pallas as pl
from jax.experimental.pallas import tpu as pltpu

N_INPUT = 13        # wine dataset feature count
N_INTERNAL = 13     # hidden width (fixed in WineNet.__init__)
N_OUTPUT = 3        # number of wine classes
LANE = 128          # pad feature / hidden dims to one 128-lane vreg row
SINGLE_STEP_MAX = 2048   # up to this many rows -> a single grid step
LARGE_BATCH_TILE = 512   # rows per grid step beyond that


def winenet_kernel(x_ref, w_ref, b_ref, o_ref, xpad_ref):
    """One batch tile of WineNet.forward(): fc1->ReLU->fc2->ReLU->fc3 (logits).

    x_ref    : (tile, 13)    raw input features (zero-extended in-kernel)
    w_ref    : (3, 128, 128) W1, W2, W3, each zero-padded, stored [in, out]
    b_ref    : (8, 128)      rows 0..2 = b1, b2, b3 zero-padded (f32)
    o_ref    : (tile, 3)     logits
    xpad_ref : (tile, 128)   VMEM scratch for the lane-padded input
    """
    # Zero-extend the 13 feature columns to a full 128-lane row inside VMEM
    # (instead of streaming a host-padded (B, 128) array from HBM).
    xpad_ref[...] = jnp.zeros_like(xpad_ref)
    xpad_ref[:, :N_INPUT] = x_ref[...]
    x = xpad_ref[...]

    # fc1 + ReLU. Padded lanes stay exactly zero: padded W rows/cols and the
    # padded bias lanes are zero, so the 128-wide math equals the 13-wide math.
    h = jnp.dot(x, w_ref[0], preferred_element_type=jnp.float32) + b_ref[0:1, :]
    h = jnp.maximum(h, 0.0)

    # fc2 + ReLU. Keep elementwise math (and the intermediate h) in f32 so the
    # v5e VPU path stays clean even when the weight slab is bf16.
    w2 = w_ref[1].astype(jnp.float32)
    h = jnp.dot(h, w2, preferred_element_type=jnp.float32) + b_ref[1:2, :]
    h = jnp.maximum(h, 0.0)

    # fc3 -> logits (PyTorch forward() does NOT apply softmax).
    w3 = w_ref[2].astype(jnp.float32)
    h = jnp.dot(h, w3, preferred_element_type=jnp.float32) + b_ref[2:3, :]

    # Only the 3 real output lanes go back to HBM.
    o_ref[...] = h[:, :N_OUTPUT].astype(o_ref.dtype)


def pack_params(w1, b1, w2, b2, w3, b3, *, dtype=jnp.float32):
    """Pack the six Linear params into two slabs (2 DMAs, VMEM-resident).

    NOTE: weights here are stored [in, out]; a PyTorch state_dict stores
    nn.Linear.weight as [out, in] -> transpose before calling this.
    Use dtype=jnp.bfloat16 on v6e/v7x to halve the x/weight HBM stream
    (accumulation stays f32 inside the kernel); biases always stay f32.
    """
    def pad_w(w):
        out = jnp.zeros((LANE, LANE), jnp.float32)
        return out.at[: w.shape[0], : w.shape[1]].set(w)

    w_slab = jnp.stack([pad_w(w1), pad_w(w2), pad_w(w3)]).astype(dtype)  # (3,128,128)
    b_slab = jnp.zeros((8, LANE), jnp.float32)                           # (8,128)
    b_slab = b_slab.at[0, : b1.shape[-1]].set(b1.reshape(-1))
    b_slab = b_slab.at[1, : b2.shape[-1]].set(b2.reshape(-1))
    b_slab = b_slab.at[2, : b3.shape[-1]].set(b3.reshape(-1))
    return w_slab, b_slab


def _batch_tiling(batch):
    """Return (batch_pad, tile). Single grid step for small batches; 512-row
    tiles (even #steps, so both v7x TCs get work) for large ones."""
    if batch <= SINGLE_STEP_MAX:
        bp = ((batch + 7) // 8) * 8          # sublane multiple of 8
        return bp, bp
    tile = LARGE_BATCH_TILE
    two = 2 * tile                           # even grid length for v7x megacore
    bp = ((batch + two - 1) // two) * two
    return bp, tile


@jax.jit
def winenet_forward(x, w_slab, b_slab):
    batch, n_in = x.shape
    assert n_in == N_INPUT
    in_dtype = w_slab.dtype
    batch_pad, tile = _batch_tiling(batch)

    x = x.astype(in_dtype)
    if batch_pad != batch:                   # pad rows only; features stay 13-wide
        x = jnp.pad(x, ((0, batch_pad - batch), (0, 0)))

    grid = (batch_pad // tile,)

    itemsize = jnp.dtype(in_dtype).itemsize
    flops = 2 * batch * (N_INPUT * N_INTERNAL + N_INTERNAL * N_INTERNAL
                         + N_INTERNAL * N_OUTPUT)
    bytes_accessed = (batch_pad * N_INPUT * itemsize      # 13-wide x stream
                      + batch_pad * N_OUTPUT * 4          # 3-wide logits writeback
                      + w_slab.size * itemsize
                      + b_slab.size * 4)

    out_pad = pl.pallas_call(
        winenet_kernel,
        out_shape=jax.ShapeDtypeStruct((batch_pad, N_OUTPUT), jnp.float32),
        grid=grid,
        in_specs=[
            # Raw 13-wide x streams per batch tile (last dim == full array dim).
            pl.BlockSpec((tile, N_INPUT), lambda i: (i, 0)),
            # Parameter slabs: constant index_map -> stay VMEM-resident.
            pl.BlockSpec(w_slab.shape, lambda i: (0, 0, 0)),
            pl.BlockSpec(b_slab.shape, lambda i: (0, 0)),
        ],
        out_specs=pl.BlockSpec((tile, N_OUTPUT), lambda i: (i, 0)),
        scratch_shapes=[pltpu.VMEM((tile, LANE), in_dtype)],
        compiler_params=pltpu.CompilerParams(
            dimension_semantics=("parallel",)),  # shards batch across TCs on v7x
        cost_estimate=pl.CostEstimate(
            flops=flops, transcendentals=0, bytes_accessed=bytes_accessed),
    )(x, w_slab, b_slab)

    return out_pad[:batch]


def init_params(key):
    """Deterministic parameters matching PyTorch nn.Linear init/shapes.

    PyTorch stores weight as [out, in]; we store the transpose [in, out]."""
    ks = jax.random.split(key, 6)

    def linear(kw, kb, n_in, n_out):
        bound = 1.0 / jnp.sqrt(n_in)
        w = jax.random.uniform(kw, (n_in, n_out), jnp.float32, -bound, bound)
        b = jax.random.uniform(kb, (n_out,), jnp.float32, -bound, bound)
        return w, b

    w1, b1 = linear(ks[0], ks[1], N_INPUT, N_INTERNAL)
    w2, b2 = linear(ks[2], ks[3], N_INTERNAL, N_INTERNAL)
    w3, b3 = linear(ks[4], ks[5], N_INTERNAL, N_OUTPUT)
    return w1, b1, w2, b2, w3, b3


if __name__ == "__main__":
    BATCH = 256
    key = jax.random.PRNGKey(0)
    k_x, k_p = jax.random.split(key)
    x = jax.random.normal(k_x, (BATCH, N_INPUT), jnp.float32)
    params = init_params(k_p)

    # f32 demo (tight numerical check). For v6e/v7x at scale, call
    # pack_params(*params, dtype=jnp.bfloat16) to halve the HBM stream.
    w_slab, b_slab = pack_params(*params)
    out = jax.block_until_ready(winenet_forward(x, w_slab, b_slab))

    # Pure-JAX reference (same math as the PyTorch forward()).
    w1, b1, w2, b2, w3, b3 = params
    ref = jnp.maximum(x @ w1 + b1, 0.0)
    ref = jnp.maximum(ref @ w2 + b2, 0.0)
    ref = ref @ w3 + b3
    assert out.shape == (BATCH, N_OUTPUT)
    assert jnp.allclose(out, ref, atol=1e-5, rtol=1e-5)

    print("KERNEL_OK")
</pallas_src>

<mosaic_0001>
module attributes {stable_mosaic.version = 11 : i64} {
  func.func @winenet_kernel(%arg0: i32, %arg1: memref<256x13xf32, #tpu.memory_space<vmem>>, %arg2: memref<3x128x128xf32, #tpu.memory_space<vmem>>, %arg3: memref<8x128xf32, #tpu.memory_space<vmem>>, %arg4: memref<256x3xf32, #tpu.memory_space<vmem>>, %arg5: memref<256x128xf32, #tpu.memory_space<vmem>>) attributes {dimension_semantics = [#tpu.dimension_semantics<parallel>], iteration_bounds = array<i64: 1>, scalar_prefetch = 0 : i64, scratch_operands = 1 : i64, tpu.core_type = #tpu.core_type<tc>, window_params = [{transform_indices = @transform_0, window_bounds = array<i64: 256, 13>}, {pipeline_mode = #tpu.pipeline_mode<synchronous>, transform_indices = @transform_1, window_bounds = array<i64: 3, 128, 128>}, {pipeline_mode = #tpu.pipeline_mode<synchronous>, transform_indices = @transform_2, window_bounds = array<i64: 8, 128>}, {transform_indices = @transform_3, window_bounds = array<i64: 256, 3>}]} {
    %cst = arith.constant 0.000000e+00 : f32
    %0 = vector.broadcast %cst : f32 to vector<256x128xf32>
    %c0 = arith.constant 0 : index
    %c0_0 = arith.constant 0 : index
    %1 = vector.load %arg5[%c0, %c0_0] : memref<256x128xf32, #tpu.memory_space<vmem>>, vector<256x128xf32>
    tpu.vector_store %arg5[%c0, %c0_0], %0 {strides = array<i32>} : memref<256x128xf32, #tpu.memory_space<vmem>>, vector<256x128xf32>,
    %c0_1 = arith.constant 0 : index
    %c0_2 = arith.constant 0 : index
    %2 = vector.load %arg1[%c0_1, %c0_2] : memref<256x13xf32, #tpu.memory_space<vmem>>, vector<256x13xf32>
    %c0_3 = arith.constant 0 : index
    %c0_4 = arith.constant 0 : index
    %3 = vector.load %arg5[%c0_3, %c0_4] : memref<256x128xf32, #tpu.memory_space<vmem>>, vector<256x13xf32>
    tpu.vector_store %arg5[%c0_3, %c0_4], %2 {strides = array<i32>} : memref<256x128xf32, #tpu.memory_space<vmem>>, vector<256x13xf32>,
    %c0_5 = arith.constant 0 : index
    %c0_6 = arith.constant 0 : index
    %4 = vector.load %arg5[%c0_5, %c0_6] : memref<256x128xf32, #tpu.memory_space<vmem>>, vector<256x128xf32>
    %c0_7 = arith.constant 0 : index
    %c0_8 = arith.constant 0 : index
    %c0_9 = arith.constant 0 : index
    %5 = vector.load %arg2[%c0_7, %c0_8, %c0_9] : memref<3x128x128xf32, #tpu.memory_space<vmem>>, vector<1x128x128xf32>
    %6 = vector.shape_cast %5 : vector<1x128x128xf32> to vector<128x128xf32>
    %cst_10 = arith.constant dense<0.000000e+00> : vector<256x128xf32>
    %7 = tpu.matmul %4, %6, %cst_10 {dimension_numbers = #tpu.dot_dimension_numbers<[1], [0], [0], [1], [0, 0, 1, 1], [], []>} : vector<256x128xf32>, vector<128x128xf32>, vector<256x128xf32> -> vector<256x128xf32>
    %c0_11 = arith.constant 0 : index
    %c0_12 = arith.constant 0 : index
    %8 = vector.load %arg3[%c0_11, %c0_12] : memref<8x128xf32, #tpu.memory_space<vmem>>, vector<1x128xf32>
    %9 = vector.broadcast %8 : vector<1x128xf32> to vector<256x128xf32>
    %10 = arith.addf %7, %9 : vector<256x128xf32>
    %cst_13 = arith.constant 0.000000e+00 : f32
    %11 = vector.broadcast %cst_13 : f32 to vector<256x128xf32>
    %12 = arith.maximumf %10, %11 : vector<256x128xf32>
    %c1 = arith.constant 1 : index
    %c0_14 = arith.constant 0 : index
    %c0_15 = arith.constant 0 : index
    %13 = vector.load %arg2[%c1, %c0_14, %c0_15] : memref<3x128x128xf32, #tpu.memory_space<vmem>>, vector<1x128x128xf32>
    %14 = vector.shape_cast %13 : vector<1x128x128xf32> to vector<128x128xf32>
    %cst_16 = arith.constant dense<0.000000e+00> : vector<256x128xf32>
    %15 = tpu.matmul %12, %14, %cst_16 {dimension_numbers = #tpu.dot_dimension_numbers<[1], [0], [0], [1], [0, 0, 1, 1], [], []>} : vector<256x128xf32>, vector<128x128xf32>, vector<256x128xf32> -> vector<256x128xf32>
    %c1_17 = arith.constant 1 : index
    %c0_18 = arith.constant 0 : index
    %16 = vector.load %arg3[%c1_17, %c0_18] : memref<8x128xf32, #tpu.memory_space<vmem>>, vector<1x128xf32>
    %17 = vector.broadcast %16 : vector<1x128xf32> to vector<256x128xf32>
    %18 = arith.addf %15, %17 : vector<256x128xf32>
    %cst_19 = arith.constant 0.000000e+00 : f32
    %19 = vector.broadcast %cst_19 : f32 to vector<256x128xf32>
    %20 = arith.maximumf %18, %19 : vector<256x128xf32>
    %c2 = arith.constant 2 : index
    %c0_20 = arith.constant 0 : index
    %c0_21 = arith.constant 0 : index
    %21 = vector.load %arg2[%c2, %c0_20, %c0_21] : memref<3x128x128xf32, #tpu.memory_space<vmem>>, vector<1x128x128xf32>
    %22 = vector.shape_cast %21 : vector<1x128x128xf32> to vector<128x128xf32>
    %cst_22 = arith.constant dense<0.000000e+00> : vector<256x128xf32>
    %23 = tpu.matmul %20, %22, %cst_22 {dimension_numbers = #tpu.dot_dimension_numbers<[1], [0], [0], [1], [0, 0, 1, 1], [], []>} : vector<256x128xf32>, vector<128x128xf32>, vector<256x128xf32> -> vector<256x128xf32>
    %c2_23 = arith.constant 2 : index
    %c0_24 = arith.constant 0 : index
    %24 = vector.load %arg3[%c2_23, %c0_24] : memref<8x128xf32, #tpu.memory_space<vmem>>, vector<1x128xf32>
    %25 = vector.broadcast %24 : vector<1x128xf32> to vector<256x128xf32>
    %26 = arith.addf %23, %25 : vector<256x128xf32>
    %27 = vector.extract_strided_slice %26 {offsets = [0, 0], sizes = [256, 3], strides = [1, 1]} : vector<256x128xf32> to vector<256x3xf32>
    %c0_25 = arith.constant 0 : index
    %c0_26 = arith.constant 0 : index
    %28 = vector.load %arg4[%c0_25, %c0_26] : memref<256x3xf32, #tpu.memory_space<vmem>>, vector<256x3xf32>
    tpu.vector_store %arg4[%c0_25, %c0_26], %27 {strides = array<i32>} : memref<256x3xf32, #tpu.memory_space<vmem>>, vector<256x3xf32>,
    return
  }
  func.func @transform_0(%arg0: i32) -> (i32, i32) {
    %c0_i32 = arith.constant 0 : i32
    %c0_i32_0 = arith.constant 0 : i32
    return %arg0, %c0_i32 : i32, i32
  }
  func.func @transform_1(%arg0: i32) -> (i32, i32, i32) {
    %c0_i32 = arith.constant 0 : i32
    %c0_i32_0 = arith.constant 0 : i32
    %c0_i32_1 = arith.constant 0 : i32
    %c0_i32_2 = arith.constant 0 : i32
    return %c0_i32, %c0_i32_0, %c0_i32_1 : i32, i32, i32
  }
  func.func @transform_2(%arg0: i32) -> (i32, i32) {
    %c0_i32 = arith.constant 0 : i32
    %c0_i32_0 = arith.constant 0 : i32
    %c0_i32_1 = arith.constant 0 : i32
    return %c0_i32, %c0_i32_0 : i32, i32
  }
  func.func @transform_3(%arg0: i32) -> (i32, i32) {
    %c0_i32 = arith.constant 0 : i32
    %c0_i32_0 = arith.constant 0 : i32
    return %arg0, %c0_i32 : i32, i32
  }
}

</mosaic_0001>

<llo_original>
// kernel: winenet_forward.1
$region0: #{winenet_forward.1}
  #allocation0 [shape = 'u32[]', space=smem, size = 0x4, offset = 0x4, fixed_abs, tag = 'smem constant byte address 0x4 - core index']
  #allocation1 [shape = 'u32[72,128]{1,0:T(1,128)}', space=vmem, size = 0x9000, scoped, tag = 'internal scratch']
  #allocation2 [shape = 'f32[256,128]{1,0:T(8,128)}', space=vmem, size = 0x20000, scoped, tag = 'scratch operand']
  %s0 = inlined_call_operand.vmem [shape: f32[256,13], index: 0, kind: input, shape index: {}]
  %s1 = inlined_call_operand.hbm [shape: f32[3,128,128], index: 1, kind: input, shape index: {}]
  %s2 = inlined_call_operand.vmem [shape: f32[8,128], index: 2, kind: input, shape index: {}]
  %s3 = inlined_call_operand.vmem [shape: f32[256,3], index: 3, kind: output, shape index: {}]
  %s4 = sld [smem:[#allocation0]]
  $region26: #{winenet_forward.1} parent=0
    _
  %s6 = ssub.s32 1, %s4
  %s7 = scalar_select 0, %s6, %s4
  $region1: #{winenet_forward.1} parent=0
    #allocation3 [shape = 'u8[196608]{0}', space=vmem, size = 0x30000, scoped, tag = 'input window, operand 1, single buffered']
    #allocation4 [shape = 's32[1]{0}', space=sflag, size = 0x4, scoped, tag = 'scoped memory for winenet_forward.1']
    %8 = vsyncpa [#allocation4], 0
    // Predicated region
    $region2: #{winenet_forward.1} parent=1 // pred_check
      _
    $region3: #{winenet_forward.1} parent=1 // pred_check_branch
      %10 = sbr.rel (0) target = $region5
    $region4: #{winenet_forward.1} parent=1 // pred_region
      _
    $region5: #{winenet_forward.1} parent=1 // pred_fallthru
      _
    // Predicated region
    $region6: #{winenet_forward.1} parent=1 // pred_check
      _
    $region7: #{winenet_forward.1} parent=1 // pred_check_branch
      %12 = sbr.rel (0) target = $region9
    $region8: #{winenet_forward.1} parent=1 // pred_region
      %14 = vsyncadd [#allocation4], 0
      %s15 = sshll.u32 %s1, 4
      %s16 = int_to_ptr.hbm [resolvable:$true] %s15
      %s17 = sshll.u32 [#allocation3], 4
      %s18 = int_to_ptr.vmem [resolvable:$true] %s17
      %23 = dma.hbm_to_vmem [thread:$0]  %s16, 6144, %s18, [#allocation4], 128, 128, 8
    $region9: #{winenet_forward.1} parent=1 // pred_fallthru
      _
    // Predicated region
    $region10: #{winenet_forward.1} parent=1 // pred_check
      _
    $region11: #{winenet_forward.1} parent=1 // pred_check_branch
      %25 = sbr.rel (0) target = $region13
    $region12: #{winenet_forward.1} parent=1 // pred_region
      _
    $region13: #{winenet_forward.1} parent=1 // pred_fallthru
      _
    // Predicated region
    $region14: #{winenet_forward.1} parent=1 // pred_check
      _
    $region15: #{winenet_forward.1} parent=1 // pred_check_branch
      %27 = sbr.rel (0) target = $region17
    $region16: #{winenet_forward.1} parent=1 // pred_region
      %29 = dma.done [#allocation4], 6144
    $region17: #{winenet_forward.1} parent=1 // pred_fallthru
      _
    %30 = vst [vmem:[#allocation2] sm:$0xff] 0.0
    %31 = vst [vmem:[#allocation2 + $0x8] sm:$0xff] 0.0
    %32 = vst [vmem:[#allocation2 + $0x10] sm:$0xff] 0.0
    %33 = vst [vmem:[#allocation2 + $0x18] sm:$0xff] 0.0
    %34 = vst [vmem:[#allocation2 + $0x20] sm:$0xff] 0.0
    %35 = vst [vmem:[#allocation2 + $0x28] sm:$0xff] 0.0
    %36 = vst [vmem:[#allocation2 + $0x30] sm:$0xff] 0.0
    %37 = vst [vmem:[#allocation2 + $0x38] sm:$0xff] 0.0
    %38 = vst [vmem:[#allocation2 + $0x40] sm:$0xff] 0.0
    %39 = vst [vmem:[#allocation2 + $0x48] sm:$0xff] 0.0
    %40 = vst [vmem:[#allocation2 + $0x50] sm:$0xff] 0.0
    %41 = vst [vmem:[#allocation2 + $0x58] sm:$0xff] 0.0
    %42 = vst [vmem:[#allocation2 + $0x60] sm:$0xff] 0.0
    %43 = vst [vmem:[#allocation2 + $0x68] sm:$0xff] 0.0
    %44 = vst [vmem:[#allocation2 + $0x70] sm:$0xff] 0.0
    %45 = vst [vmem:[#allocation2 + $0x78] sm:$0xff] 0.0
    %46 = vst [vmem:[#allocation2 + $0x80] sm:$0xff] 0.0
    %47 = vst [vmem:[#allocation2 + $0x88] sm:$0xff] 0.0
    %48 = vst [vmem:[#allocation2 + $0x90] sm:$0xff] 0.0
    %49 = vst [vmem:[#allocation2 + $0x98] sm:$0xff] 0.0
    %50 = vst [vmem:[#allocation2 + $0xa0] sm:$0xff] 0.0
    %51 = vst [vmem:[#allocation2 + $0xa8] sm:$0xff] 0.0
    %52 = vst [vmem:[#allocation2 + $0xb0] sm:$0xff] 0.0
    %53 = vst [vmem:[#allocation2 + $0xb8] sm:$0xff] 0.0
    %54 = vst [vmem:[#allocation2 + $0xc0] sm:$0xff] 0.0
    %55 = vst [vmem:[#allocation2 + $0xc8] sm:$0xff] 0.0
    %56 = vst [vmem:[#allocation2 + $0xd0] sm:$0xff] 0.0
    %57 = vst [vmem:[#allocation2 + $0xd8] sm:$0xff] 0.0
    %58 = vst [vmem:[#allocation2 + $0xe0] sm:$0xff] 0.0
    %59 = vst [vmem:[#allocation2 + $0xe8] sm:$0xff] 0.0
    %60 = vst [vmem:[#allocation2 + $0xf0] sm:$0xff] 0.0
    %61 = vst [vmem:[#allocation2 + $0xf8] sm:$0xff] 0.0
    %v62 = vld [vmem:[%s0] sm:$0xff]
    %v63 = vld [vmem:[%s0 + $0x8] sm:$0xff]
    %v64 = vld [vmem:[%s0 + $0x10] sm:$0xff]
    %v65 = vld [vmem:[%s0 + $0x18] sm:$0xff]
    %v66 = vld [vmem:[%s0 + $0x20] sm:$0xff]
    %v67 = vld [vmem:[%s0 + $0x28] sm:$0xff]
    %v68 = vld [vmem:[%s0 + $0x30] sm:$0xff]
    %v69 = vld [vmem:[%s0 + $0x38] sm:$0xff]
    %v70 = vld [vmem:[%s0 + $0x40] sm:$0xff]
    %v71 = vld [vmem:[%s0 + $0x48] sm:$0xff]
    %v72 = vld [vmem:[%s0 + $0x50] sm:$0xff]
    %v73 = vld [vmem:[%s0 + $0x58] sm:$0xff]
    %v74 = vld [vmem:[%s0 + $0x60] sm:$0xff]
    %v75 = vld [vmem:[%s0 + $0x68] sm:$0xff]
    %v76 = vld [vmem:[%s0 + $0x70] sm:$0xff]
    %v77 = vld [vmem:[%s0 + $0x78] sm:$0xff]
    %v78 = vld [vmem:[%s0 + $0x80] sm:$0xff]
    %v79 = vld [vmem:[%s0 + $0x88] sm:$0xff]
    %v80 = vld [vmem:[%s0 + $0x90] sm:$0xff]
    %v81 = vld [vmem:[%s0 + $0x98] sm:$0xff]
    %v82 = vld [vmem:[%s0 + $0xa0] sm:$0xff]
    %v83 = vld [vmem:[%s0 + $0xa8] sm:$0xff]
    %v84 = vld [vmem:[%s0 + $0xb0] sm:$0xff]
    %v85 = vld [vmem:[%s0 + $0xb8] sm:$0xff]
    %v86 = vld [vmem:[%s0 + $0xc0] sm:$0xff]
    %v87 = vld [vmem:[%s0 + $0xc8] sm:$0xff]
    %v88 = vld [vmem:[%s0 + $0xd0] sm:$0xff]
    %v89 = vld [vmem:[%s0 + $0xd8] sm:$0xff]
    %v90 = vld [vmem:[%s0 + $0xe0] sm:$0xff]
    %v91 = vld [vmem:[%s0 + $0xe8] sm:$0xff]
    %v92 = vld [vmem:[%s0 + $0xf0] sm:$0xff]
    %v93 = vld [vmem:[%s0 + $0xf8] sm:$0xff]
    %vm94 = vcmask 105472
    %95 = vst.msk [vmem:[#allocation2] sm:$0xff] %vm94, %v62
    %96 = vst.msk [vmem:[#allocation2 + $0x8] sm:$0xff] %vm94, %v63
    %97 = vst.msk [vmem:[#allocation2 + $0x10] sm:$0xff] %vm94, %v64
    %98 = vst.msk [vmem:[#allocation2 + $0x18] sm:$0xff] %vm94, %v65
    %99 = vst.msk [vmem:[#allocation2 + $0x20] sm:$0xff] %vm94, %v66
    %100 = vst.msk [vmem:[#allocation2 + $0x28] sm:$0xff] %vm94, %v67
    %101 = vst.msk [vmem:[#allocation2 + $0x30] sm:$0xff] %vm94, %v68
    %102 = vst.msk [vmem:[#allocation2 + $0x38] sm:$0xff] %vm94, %v69
    %103 = vst.msk [vmem:[#allocation2 + $0x40] sm:$0xff] %vm94, %v70
    %104 = vst.msk [vmem:[#allocation2 + $0x48] sm:$0xff] %vm94, %v71
    %105 = vst.msk [vmem:[#allocation2 + $0x50] sm:$0xff] %vm94, %v72
    %106 = vst.msk [vmem:[#allocation2 + $0x58] sm:$0xff] %vm94, %v73
    %107 = vst.msk [vmem:[#allocation2 + $0x60] sm:$0xff] %vm94, %v74
    %108 = vst.msk [vmem:[#allocation2 + $0x68] sm:$0xff] %vm94, %v75
    %109 = vst.msk [vmem:[#allocation2 + $0x70] sm:$0xff] %vm94, %v76
    %110 = vst.msk [vmem:[#allocation2 + $0x78] sm:$0xff] %vm94, %v77
    %111 = vst.msk [vmem:[#allocation2 + $0x80] sm:$0xff] %vm94, %v78
    %112 = vst.msk [vmem:[#allocation2 + $0x88] sm:$0xff] %vm94, %v79
    %113 = vst.msk [vmem:[#allocation2 + $0x90] sm:$0xff] %vm94, %v80
    %114 = vst.msk [vmem:[#allocation2 + $0x98] sm:$0xff] %vm94, %v81
    %115 = vst.msk [vmem:[#allocation2 + $0xa0] sm:$0xff] %vm94, %v82
    %116 = vst.msk [vmem:[#allocation2 + $0xa8] sm:$0xff] %vm94, %v83
    %117 = vst.msk [vmem:[#allocation2 + $0xb0] sm:$0xff] %vm94, %v84
    %118 = vst.msk [vmem:[#allocation2 + $0xb8] sm:$0xff] %vm94, %v85
    %119 = vst.msk [vmem:[#allocation2 + $0xc0] sm:$0xff] %vm94, %v86
    %120 = vst.msk [vmem:[#allocation2 + $0xc8] sm:$0xff] %vm94, %v87
    %121 = vst.msk [vmem:[#allocation2 + $0xd0] sm:$0xff] %vm94, %v88
    %122 = vst.msk [vmem:[#allocation2 + $0xd8] sm:$0xff] %vm94, %v89
    %123 = vst.msk [vmem:[#allocation2 + $0xe0] sm:$0xff] %vm94, %v90
    %124 = vst.msk [vmem:[#allocation2 + $0xe8] sm:$0xff] %vm94, %v91
    %125 = vst.msk [vmem:[#allocation2 + $0xf0] sm:$0xff] %vm94, %v92
    %126 = vst.msk [vmem:[#allocation2 + $0xf8] sm:$0xff] %vm94, %v93
    %v127 = vld [vmem:[#allocation2] sm:$0xff]
    %v128 = vld [vmem:[#allocation2 + $0x8] sm:$0xff]
    %v129 = vld [vmem:[#allocation2 + $0x10] sm:$0xff]
    %v130 = vld [vmem:[#allocation2 + $0x18] sm:$0xff]
    %v131 = vld [vmem:[#allocation2 + $0x20] sm:$0xff]
    %v132 = vld [vmem:[#allocation2 + $0x28] sm:$0xff]
    %v133 = vld [vmem:[#allocation2 + $0x30] sm:$0xff]
    %v134 = vld [vmem:[#allocation2 + $0x38] sm:$0xff]
    %v135 = vld [vmem:[#allocation2 + $0x40] sm:$0xff]
    %v136 = vld [vmem:[#allocation2 + $0x48] sm:$0xff]
    %v137 = vld [vmem:[#allocation2 + $0x50] sm:$0xff]
    %v138 = vld [vmem:[#allocation2 + $0x58] sm:$0xff]
    %v139 = vld [vmem:[#allocation2 + $0x60] sm:$0xff]
    %v140 = vld [vmem:[#allocation2 + $0x68] sm:$0xff]
    %v141 = vld [vmem:[#allocation2 + $0x70] sm:$0xff]
    %v142 = vld [vmem:[#allocation2 + $0x78] sm:$0xff]
    %v143 = vld [vmem:[#allocation2 + $0x80] sm:$0xff]
    %v144 = vld [vmem:[#allocation2 + $0x88] sm:$0xff]
    %v145 = vld [vmem:[#allocation2 + $0x90] sm:$0xff]
    %v146 = vld [vmem:[#allocation2 + $0x98] sm:$0xff]
    %v147 = vld [vmem:[#allocation2 + $0xa0] sm:$0xff]
    %v148 = vld [vmem:[#allocation2 + $0xa8] sm:$0xff]
    %v149 = vld [vmem:[#allocation2 + $0xb0] sm:$0xff]
    %v150 = vld [vmem:[#allocation2 + $0xb8] sm:$0xff]
    %v151 = vld [vmem:[#allocation2 + $0xc0] sm:$0xff]
    %v152 = vld [vmem:[#allocation2 + $0xc8] sm:$0xff]
    %v153 = vld [vmem:[#allocation2 + $0xd0] sm:$0xff]
    %v154 = vld [vmem:[#allocation2 + $0xd8] sm:$0xff]
    %v155 = vld [vmem:[#allocation2 + $0xe0] sm:$0xff]
    %v156 = vld [vmem:[#allocation2 + $0xe8] sm:$0xff]
    %v157 = vld [vmem:[#allocation2 + $0xf0] sm:$0xff]
    %v158 = vld [vmem:[#allocation2 + $0xf8] sm:$0xff]
    %v159 = vld [vmem:[#allocation3] sm:$0xff]
    %v160 = vld [vmem:[#allocation3 + $0x8] sm:$0xff]
    %v161 = vld [vmem:[#allocation3 + $0x10] sm:$0xff]
    %v162 = vld [vmem:[#allocation3 + $0x18] sm:$0xff]
    %v163 = vld [vmem:[#allocation3 + $0x20] sm:$0xff]
    %v164 = vld [vmem:[#allocation3 + $0x28] sm:$0xff]
    %v165 = vld [vmem:[#allocation3 + $0x30] sm:$0xff]
    %v166 = vld [vmem:[#allocation3 + $0x38] sm:$0xff]
    %v167 = vld [vmem:[#allocation3 + $0x40] sm:$0xff]
    %v168 = vld [vmem:[#allocation3 + $0x48] sm:$0xff]
    %v169 = vld [vmem:[#allocation3 + $0x50] sm:$0xff]
    %v170 = vld [vmem:[#allocation3 + $0x58] sm:$0xff]
    %v171 = vld [vmem:[#allocation3 + $0x60] sm:$0xff]
    %v172 = vld [vmem:[#allocation3 + $0x68] sm:$0xff]
    %v173 = vld [vmem:[#allocation3 + $0x70] sm:$0xff]
    %v174 = vld [vmem:[#allocation3 + $0x78] sm:$0xff]
    %v175 = vld [vmem:[%s2] sm:$0x1]
    %v176 = vperm.slane %v175, 0
    %177 = vmatpush.msra.mxu0 %v174
    %178 = vmatpush.msra.mxu0 %v173
    %179 = vmatpush.msra.mxu0 %v172
    %180 = vmatpush.msra.mxu0 %v171
    %181 = vmatpush.msra.mxu0 %v170
    %182 = vmatpush.msra.mxu0 %v169
    %183 = vmatpush.msra.mxu0 %v168
    %184 = vmatpush.msra.mxu0 %v167
    %185 = vmatpush.msra.mxu0 %v166
    %186 = vmatpush.msra.mxu0 %v165
    %187 = vmatpush.msra.mxu0 %v164
    %188 = vmatpush.msra.mxu0 %v163
    %189 = vmatpush.msra.mxu0 %v162
    %190 = vmatpush.msra.mxu0 %v161
    %191 = vmatpush.msra.mxu0 %v160
    %192 = vmatpush.msra.mxu0 %v159
    %193 = vmatmul.f32.gmra.mxu0 %v127
    %v194 = vpop.f32.mrf.mxu0
    %v195 = vadd.f32 %v176, %v194
    %196 = vmatmul.f32.gmra.mxu0 %v128
    %v197 = vpop.f32.mrf.mxu0
    %v198 = vadd.f32 %v176, %v197
    %199 = vmatmul.f32.gmra.mxu0 %v129
    %v200 = vpop.f32.mrf.mxu0
    %v201 = vadd.f32 %v176, %v200
    %202 = vmatmul.f32.gmra.mxu0 %v130
    %v203 = vpop.f32.mrf.mxu0
    %v204 = vadd.f32 %v176, %v203
    %205 = vmatmul.f32.gmra.mxu0 %v131
    %v206 = vpop.f32.mrf.mxu0
    %v207 = vadd.f32 %v176, %v206
    %208 = vmatmul.f32.gmra.mxu0 %v132
    %v209 = vpop.f32.mrf.mxu0
    %v210 = vadd.f32 %v176, %v209
    %211 = vmatmul.f32.gmra.mxu0 %v133
    %v212 = vpop.f32.mrf.mxu0
    %v213 = vadd.f32 %v176, %v212
    %214 = vmatmul.f32.gmra.mxu0 %v134
    %v215 = vpop.f32.mrf.mxu0
    %v216 = vadd.f32 %v176, %v215
    %217 = vmatmul.f32.gmra.mxu0 %v135
    %v218 = vpop.f32.mrf.mxu0
    %v219 = vadd.f32 %v176, %v218
    %220 = vmatmul.f32.gmra.mxu0 %v136
    %v221 = vpop.f32.mrf.mxu0
    %v222 = vadd.f32 %v176, %v221
    %223 = vmatmul.f32.gmra.mxu0 %v137
    %v224 = vpop.f32.mrf.mxu0
    %v225 = vadd.f32 %v176, %v224
    %226 = vmatmul.f32.gmra.mxu0 %v138
    %v227 = vpop.f32.mrf.mxu0
    %v228 = vadd.f32 %v176, %v227
    %229 = vmatmul.f32.gmra.mxu0 %v139
    %v230 = vpop.f32.mrf.mxu0
    %v231 = vadd.f32 %v176, %v230
    %232 = vmatmul.f32.gmra.mxu0 %v140
    %v233 = vpop.f32.mrf.mxu0
    %v234 = vadd.f32 %v176, %v233
    %235 = vmatmul.f32.gmra.mxu0 %v141
    %v236 = vpop.f32.mrf.mxu0
    %v237 = vadd.f32 %v176, %v236
    %238 = vmatmul.f32.gmra.mxu0 %v142
    %v239 = vpop.f32.mrf.mxu0
    %v240 = vadd.f32 %v176, %v239
    %241 = vmatmul.f32.gmra.mxu0 %v143
    %v242 = vpop.f32.mrf.mxu0
    %v243 = vadd.f32 %v176, %v242
    %244 = vmatmul.f32.gmra.mxu0 %v144
    %v245 = vpop.f32.mrf.mxu0
    %v246 = vadd.f32 %v176, %v245
    %247 = vmatmul.f32.gmra.mxu0 %v145
    %v248 = vpop.f32.mrf.mxu0
    %v249 = vadd.f32 %v176, %v248
    %250 = vmatmul.f32.gmra.mxu0 %v146
    %v251 = vpop.f32.mrf.mxu0
    %v252 = vadd.f32 %v176, %v251
    %253 = vmatmul.f32.gmra.mxu0 %v147
    %v254 = vpop.f32.mrf.mxu0
    %v255 = vadd.f32 %v176, %v254
    %256 = vmatmul.f32.gmra.mxu0 %v148
    %v257 = vpop.f32.mrf.mxu0
    %v258 = vadd.f32 %v176, %v257
    %259 = vmatmul.f32.gmra.mxu0 %v149
    %v260 = vpop.f32.mrf.mxu0
    %v261 = vadd.f32 %v176, %v260
    %262 = vmatmul.f32.gmra.mxu0 %v150
    %v263 = vpop.f32.mrf.mxu0
    %v264 = vadd.f32 %v176, %v263
    %265 = vmatmul.f32.gmra.mxu0 %v151
    %v266 = vpop.f32.mrf.mxu0
    %v267 = vadd.f32 %v176, %v266
    %268 = vmatmul.f32.gmra.mxu0 %v152
    %v269 = vpop.f32.mrf.mxu0
    %v270 = vadd.f32 %v176, %v269
    %271 = vmatmul.f32.gmra.mxu0 %v153
    %v272 = vpop.f32.mrf.mxu0
    %v273 = vadd.f32 %v176, %v272
    %274 = vmatmul.f32.gmra.mxu0 %v154
    %v275 = vpop.f32.mrf.mxu0
    %v276 = vadd.f32 %v176, %v275
    %277 = vmatmul.f32.gmra.mxu0 %v155
    %v278 = vpop.f32.mrf.mxu0
    %v279 = vadd.f32 %v176, %v278
    %280 = vmatmul.f32.gmra.mxu0 %v156
    %v281 = vpop.f32.mrf.mxu0
    %v282 = vadd.f32 %v176, %v281
    %283 = vmatmul.f32.gmra.mxu0 %v157
    %v284 = vpop.f32.mrf.mxu0
    %v285 = vadd.f32 %v176, %v284
    %286 = vmatmul.f32.gmra.mxu0 %v158
    %v287 = vpop.f32.mrf.mxu0
    %v288 = vadd.f32 %v176, %v287
    %289 = vdwg.mxu0
    %v290 = vmax.f32 %v195, 0.0
    %v291 = vmax.f32 %v198, 0.0
    %v292 = vmax.f32 %v201, 0.0
    %v293 = vmax.f32 %v204, 0.0
    %v294 = vmax.f32 %v207, 0.0
    %v295 = vmax.f32 %v210, 0.0
    %v296 = vmax.f32 %v213, 0.0
    %v297 = vmax.f32 %v216, 0.0
    %v298 = vmax.f32 %v219, 0.0
    %v299 = vmax.f32 %v222, 0.0
    %v300 = vmax.f32 %v225, 0.0
    %v301 = vmax.f32 %v228, 0.0
    %v302 = vmax.f32 %v231, 0.0
    %v303 = vmax.f32 %v234, 0.0
    %v304 = vmax.f32 %v237, 0.0
    %v305 = vmax.f32 %v240, 0.0
    %v306 = vmax.f32 %v243, 0.0
    %v307 = vmax.f32 %v246, 0.0
    %v308 = vmax.f32 %v249, 0.0
    %v309 = vmax.f32 %v252, 0.0
    %v310 = vmax.f32 %v255, 0.0
    %v311 = vmax.f32 %v258, 0.0
    %v312 = vmax.f32 %v261, 0.0
    %v313 = vmax.f32 %v264, 0.0
    %v314 = vmax.f32 %v267, 0.0
    %v315 = vmax.f32 %v270, 0.0
    %v316 = vmax.f32 %v273, 0.0
    %v317 = vmax.f32 %v276, 0.0
    %v318 = vmax.f32 %v279, 0.0
    %v319 = vmax.f32 %v282, 0.0
    %v320 = vmax.f32 %v285, 0.0
    %v321 = vmax.f32 %v288, 0.0
    %s322 = scalar_lea.vmem [#allocation3], 128
    %v323 = vld [vmem:[%s322] sm:$0xff]
    %v324 = vld [vmem:[%s322 + $0x8] sm:$0xff]
    %v325 = vld [vmem:[%s322 + $0x10] sm:$0xff]
    %v326 = vld [vmem:[%s322 + $0x18] sm:$0xff]
    %v327 = vld [vmem:[%s322 + $0x20] sm:$0xff]
    %v328 = vld [vmem:[%s322 + $0x28] sm:$0xff]
    %v329 = vld [vmem:[%s322 + $0x30] sm:$0xff]
    %v330 = vld [vmem:[%s322 + $0x38] sm:$0xff]
    %v331 = vld [vmem:[%s322 + $0x40] sm:$0xff]
    %v332 = vld [vmem:[%s322 + $0x48] sm:$0xff]
    %v333 = vld [vmem:[%s322 + $0x50] sm:$0xff]
    %v334 = vld [vmem:[%s322 + $0x58] sm:$0xff]
    %v335 = vld [vmem:[%s322 + $0x60] sm:$0xff]
    %v336 = vld [vmem:[%s322 + $0x68] sm:$0xff]
    %v337 = vld [vmem:[%s322 + $0x70] sm:$0xff]
    %v338 = vld [vmem:[%s322 + $0x78] sm:$0xff]
    %v339 = vld [vmem:[%s2 + $0x1] sm:$0x1]
    %v340 = vperm.slane %v339, 0
    %341 = vmatpush.msra.mxu0 %v338
    %342 = vmatpush.msra.mxu0 %v337
    %343 = vmatpush.msra.mxu0 %v336
    %344 = vmatpush.msra.mxu0 %v335
    %345 = vmatpush.msra.mxu0 %v334
    %346 = vmatpush.msra.mxu0 %v333
    %347 = vmatpush.msra.mxu0 %v332
    %348 = vmatpush.msra.mxu0 %v331
    %349 = vmatpush.msra.mxu0 %v330
    %350 = vmatpush.msra.mxu0 %v329
    %351 = vmatpush.msra.mxu0 %v328
    %352 = vmatpush.msra.mxu0 %v327
    %353 = vmatpush.msra.mxu0 %v326
    %354 = vmatpush.msra.mxu0 %v325
    %355 = vmatpush.msra.mxu0 %v324
    %356 = vmatpush.msra.mxu0 %v323
    %357 = vmatmul.f32.gmra.mxu0 %v290
    %v358 = vpop.f32.mrf.mxu0
    %v359 = vadd.f32 %v340, %v358
    %360 = vmatmul.f32.gmra.mxu0 %v291
    %v361 = vpop.f32.mrf.mxu0
    %v362 = vadd.f32 %v340, %v361
    %363 = vmatmul.f32.gmra.mxu0 %v292
    %v364 = vpop.f32.mrf.mxu0
    %v365 = vadd.f32 %v340, %v364
    %366 = vmatmul.f32.gmra.mxu0 %v293
    %v367 = vpop.f32.mrf.mxu0
    %v368 = vadd.f32 %v340, %v367
    %369 = vmatmul.f32.gmra.mxu0 %v294
    %v370 = vpop.f32.mrf.mxu0
    %v371 = vadd.f32 %v340, %v370
    %372 = vmatmul.f32.gmra.mxu0 %v295
    %v373 = vpop.f32.mrf.mxu0
    %v374 = vadd.f32 %v340, %v373
    %375 = vmatmul.f32.gmra.mxu0 %v296
    %v376 = vpop.f32.mrf.mxu0
    %v377 = vadd.f32 %v340, %v376
    %378 = vmatmul.f32.gmra.mxu0 %v297
    %v379 = vpop.f32.mrf.mxu0
    %v380 = vadd.f32 %v340, %v379
    %381 = vmatmul.f32.gmra.mxu0 %v298
    %v382 = vpop.f32.mrf.mxu0
    %v383 = vadd.f32 %v340, %v382
    %384 = vmatmul.f32.gmra.mxu0 %v299
    %v385 = vpop.f32.mrf.mxu0
    %v386 = vadd.f32 %v340, %v385
    %387 = vmatmul.f32.gmra.mxu0 %v300
    %v388 = vpop.f32.mrf.mxu0
    %v389 = vadd.f32 %v340, %v388
    %390 = vmatmul.f32.gmra.mxu0 %v301
    %v391 = vpop.f32.mrf.mxu0
    %v392 = vadd.f32 %v340, %v391
    %393 = vmatmul.f32.gmra.mxu0 %v302
    %v394 = vpop.f32.mrf.mxu0
    %v395 = vadd.f32 %v340, %v394
    %396 = vmatmul.f32.gmra.mxu0 %v303
    %v397 = vpop.f32.mrf.mxu0
    %v398 = vadd.f32 %v340, %v397
    %399 = vmatmul.f32.gmra.mxu0 %v304
    %v400 = vpop.f32.mrf.mxu0
    %v401 = vadd.f32 %v340, %v400
    %402 = vmatmul.f32.gmra.mxu0 %v305
    %v403 = vpop.f32.mrf.mxu0
    %v404 = vadd.f32 %v340, %v403
    %405 = vmatmul.f32.gmra.mxu0 %v306
    %v406 = vpop.f32.mrf.mxu0
    %v407 = vadd.f32 %v340, %v406
    %408 = vmatmul.f32.gmra.mxu0 %v307
    %v409 = vpop.f32.mrf.mxu0
    %v410 = vadd.f32 %v340, %v409
    %411 = vmatmul.f32.gmra.mxu0 %v308
    %v412 = vpop.f32.mrf.mxu0
    %v413 = vadd.f32 %v340, %v412
    %414 = vmatmul.f32.gmra.mxu0 %v309
    %v415 = vpop.f32.mrf.mxu0
    %v416 = vadd.f32 %v340, %v415
    %417 = vmatmul.f32.gmra.mxu0 %v310
    %v418 = vpop.f32.mrf.mxu0
    %v419 = vadd.f32 %v340, %v418
    %420 = vmatmul.f32.gmra.mxu0 %v311
    %v421 = vpop.f32.mrf.mxu0
    %v422 = vadd.f32 %v340, %v421
    %423 = vmatmul.f32.gmra.mxu0 %v312
    %v424 = vpop.f32.mrf.mxu0
    %v425 = vadd.f32 %v340, %v424
    %426 = vmatmul.f32.gmra.mxu0 %v313
    %v427 = vpop.f32.mrf.mxu0
    %v428 = vadd.f32 %v340, %v427
    %429 = vmatmul.f32.gmra.mxu0 %v314
    %v430 = vpop.f32.mrf.mxu0
    %v431 = vadd.f32 %v340, %v430
    %432 = vmatmul.f32.gmra.mxu0 %v315
    %v433 = vpop.f32.mrf.mxu0
    %v434 = vadd.f32 %v340, %v433
    %435 = vmatmul.f32.gmra.mxu0 %v316
    %v436 = vpop.f32.mrf.mxu0
    %v437 = vadd.f32 %v340, %v436
    %438 = vmatmul.f32.gmra.mxu0 %v317
    %v439 = vpop.f32.mrf.mxu0
    %v440 = vadd.f32 %v340, %v439
    %441 = vmatmul.f32.gmra.mxu0 %v318
    %v442 = vpop.f32.mrf.mxu0
    %v443 = vadd.f32 %v340, %v442
    %444 = vmatmul.f32.gmra.mxu0 %v319
    %v445 = vpop.f32.mrf.mxu0
    %v446 = vadd.f32 %v340, %v445
    %447 = vmatmul.f32.gmra.mxu0 %v320
    %v448 = vpop.f32.mrf.mxu0
    %v449 = vadd.f32 %v340, %v448
    %450 = vmatmul.f32.gmra.mxu0 %v321
    %v451 = vpop.f32.mrf.mxu0
    %v452 = vadd.f32 %v340, %v451
    %453 = vdwg.mxu0
    %v454 = vmax.f32 %v359, 0.0
    %v455 = vmax.f32 %v362, 0.0
    %v456 = vmax.f32 %v365, 0.0
    %v457 = vmax.f32 %v368, 0.0
    %v458 = vmax.f32 %v371, 0.0
    %v459 = vmax.f32 %v374, 0.0
    %v460 = vmax.f32 %v377, 0.0
    %v461 = vmax.f32 %v380, 0.0
    %v462 = vmax.f32 %v383, 0.0
    %v463 = vmax.f32 %v386, 0.0
    %v464 = vmax.f32 %v389, 0.0
    %v465 = vmax.f32 %v392, 0.0
    %v466 = vmax.f32 %v395, 0.0
    %v467 = vmax.f32 %v398, 0.0
    %v468 = vmax.f32 %v401, 0.0
    %v469 = vmax.f32 %v404, 0.0
    %v470 = vmax.f32 %v407, 0.0
    %v471 = vmax.f32 %v410, 0.0
    %v472 = vmax.f32 %v413, 0.0
    %v473 = vmax.f32 %v416, 0.0
    %v474 = vmax.f32 %v419, 0.0
    %v475 = vmax.f32 %v422, 0.0
    %v476 = vmax.f32 %v425, 0.0
    %v477 = vmax.f32 %v428, 0.0
    %v478 = vmax.f32 %v431, 0.0
    %v479 = vmax.f32 %v434, 0.0
    %v480 = vmax.f32 %v437, 0.0
    %v481 = vmax.f32 %v440, 0.0
    %v482 = vmax.f32 %v443, 0.0
    %v483 = vmax.f32 %v446, 0.0
    %v484 = vmax.f32 %v449, 0.0
    %v485 = vmax.f32 %v452, 0.0
    %s486 = scalar_lea.vmem [#allocation3], 256
    %v487 = vld [vmem:[%s486] sm:$0xff]
    %v488 = vld [vmem:[%s486 + $0x8] sm:$0xff]
    %v489 = vld [vmem:[%s486 + $0x10] sm:$0xff]
    %v490 = vld [vmem:[%s486 + $0x18] sm:$0xff]
    %v491 = vld [vmem:[%s486 + $0x20] sm:$0xff]
    %v492 = vld [vmem:[%s486 + $0x28] sm:$0xff]
    %v493 = vld [vmem:[%s486 + $0x30] sm:$0xff]
    %v494 = vld [vmem:[%s486 + $0x38] sm:$0xff]
    %v495 = vld [vmem:[%s486 + $0x40] sm:$0xff]
    %v496 = vld [vmem:[%s486 + $0x48] sm:$0xff]
    %v497 = vld [vmem:[%s486 + $0x50] sm:$0xff]
    %v498 = vld [vmem:[%s486 + $0x58] sm:$0xff]
    %v499 = vld [vmem:[%s486 + $0x60] sm:$0xff]
    %v500 = vld [vmem:[%s486 + $0x68] sm:$0xff]
    %v501 = vld [vmem:[%s486 + $0x70] sm:$0xff]
    %v502 = vld [vmem:[%s486 + $0x78] sm:$0xff]
    %v503 = vld [vmem:[%s2 + $0x2] sm:$0x1]
    %v504 = vperm.slane %v503, 0
    %505 = vmatpush.msra.mxu0 %v502
    %506 = vmatpush.msra.mxu0 %v501
    %507 = vmatpush.msra.mxu0 %v500
    %508 = vmatpush.msra.mxu0 %v499
    %509 = vmatpush.msra.mxu0 %v498
    %510 = vmatpush.msra.mxu0 %v497
    %511 = vmatpush.msra.mxu0 %v496
    %512 = vmatpush.msra.mxu0 %v495
    %513 = vmatpush.msra.mxu0 %v494
    %514 = vmatpush.msra.mxu0 %v493
    %515 = vmatpush.msra.mxu0 %v492
    %516 = vmatpush.msra.mxu0 %v491
    %517 = vmatpush.msra.mxu0 %v490
    %518 = vmatpush.msra.mxu0 %v489
    %519 = vmatpush.msra.mxu0 %v488
    %520 = vmatpush.msra.mxu0 %v487
    %521 = vmatmul.f32.gmra.mxu0 %v454
    %v522 = vpop.f32.mrf.mxu0
    %v523 = vadd.f32 %v504, %v522
    %524 = vmatmul.f32.gmra.mxu0 %v455
    %v525 = vpop.f32.mrf.mxu0
    %v526 = vadd.f32 %v504, %v525
    %527 = vmatmul.f32.gmra.mxu0 %v456
    %v528 = vpop.f32.mrf.mxu0
    %v529 = vadd.f32 %v504, %v528
    %530 = vmatmul.f32.gmra.mxu0 %v457
    %v531 = vpop.f32.mrf.mxu0
    %v532 = vadd.f32 %v504, %v531
    %533 = vmatmul.f32.gmra.mxu0 %v458
    %v534 = vpop.f32.mrf.mxu0
    %v535 = vadd.f32 %v504, %v534
    %536 = vmatmul.f32.gmra.mxu0 %v459
    %v537 = vpop.f32.mrf.mxu0
    %v538 = vadd.f32 %v504, %v537
    %539 = vmatmul.f32.gmra.mxu0 %v460
    %v540 = vpop.f32.mrf.mxu0
    %v541 = vadd.f32 %v504, %v540
    %542 = vmatmul.f32.gmra.mxu0 %v461
    %v543 = vpop.f32.mrf.mxu0
    %v544 = vadd.f32 %v504, %v543
    %545 = vmatmul.f32.gmra.mxu0 %v462
    %v546 = vpop.f32.mrf.mxu0
    %v547 = vadd.f32 %v504, %v546
    %548 = vmatmul.f32.gmra.mxu0 %v463
    %v549 = vpop.f32.mrf.mxu0
    %v550 = vadd.f32 %v504, %v549
    %551 = vmatmul.f32.gmra.mxu0 %v464
    %v552 = vpop.f32.mrf.mxu0
    %v553 = vadd.f32 %v504, %v552
    %554 = vmatmul.f32.gmra.mxu0 %v465
    %v555 = vpop.f32.mrf.mxu0
    %v556 = vadd.f32 %v504, %v555
    %557 = vmatmul.f32.gmra.mxu0 %v466
    %v558 = vpop.f32.mrf.mxu0
    %v559 = vadd.f32 %v504, %v558
    %560 = vmatmul.f32.gmra.mxu0 %v467
    %v561 = vpop.f32.mrf.mxu0
    %v562 = vadd.f32 %v504, %v561
    %563 = vmatmul.f32.gmra.mxu0 %v468
    %v564 = vpop.f32.mrf.mxu0
    %v565 = vadd.f32 %v504, %v564
    %566 = vmatmul.f32.gmra.mxu0 %v469
    %v567 = vpop.f32.mrf.mxu0
    %v568 = vadd.f32 %v504, %v567
    %569 = vmatmul.f32.gmra.mxu0 %v470
    %v570 = vpop.f32.mrf.mxu0
    %v571 = vadd.f32 %v504, %v570
    %572 = vmatmul.f32.gmra.mxu0 %v471
    %v573 = vpop.f32.mrf.mxu0
    %v574 = vadd.f32 %v504, %v573
    %575 = vmatmul.f32.gmra.mxu0 %v472
    %v576 = vpop.f32.mrf.mxu0
    %v577 = vadd.f32 %v504, %v576
    %578 = vmatmul.f32.gmra.mxu0 %v473
    %v579 = vpop.f32.mrf.mxu0
    %v580 = vadd.f32 %v504, %v579
    %581 = vmatmul.f32.gmra.mxu0 %v474
    %v582 = vpop.f32.mrf.mxu0
    %v583 = vadd.f32 %v504, %v582
    %584 = vmatmul.f32.gmra.mxu0 %v475
    %v585 = vpop.f32.mrf.mxu0
    %v586 = vadd.f32 %v504, %v585
    %587 = vmatmul.f32.gmra.mxu0 %v476
    %v588 = vpop.f32.mrf.mxu0
    %v589 = vadd.f32 %v504, %v588
    %590 = vmatmul.f32.gmra.mxu0 %v477
    %v591 = vpop.f32.mrf.mxu0
    %v592 = vadd.f32 %v504, %v591
    %593 = vmatmul.f32.gmra.mxu0 %v478
    %v594 = vpop.f32.mrf.mxu0
    %v595 = vadd.f32 %v504, %v594
    %596 = vmatmul.f32.gmra.mxu0 %v479
    %v597 = vpop.f32.mrf.mxu0
    %v598 = vadd.f32 %v504, %v597
    %599 = vmatmul.f32.gmra.mxu0 %v480
    %v600 = vpop.f32.mrf.mxu0
    %v601 = vadd.f32 %v504, %v600
    %602 = vmatmul.f32.gmra.mxu0 %v481
    %v603 = vpop.f32.mrf.mxu0
    %v604 = vadd.f32 %v504, %v603
    %605 = vmatmul.f32.gmra.mxu0 %v482
    %v606 = vpop.f32.mrf.mxu0
    %v607 = vadd.f32 %v504, %v606
    %608 = vmatmul.f32.gmra.mxu0 %v483
    %v609 = vpop.f32.mrf.mxu0
    %v610 = vadd.f32 %v504, %v609
    %611 = vmatmul.f32.gmra.mxu0 %v484
    %v612 = vpop.f32.mrf.mxu0
    %v613 = vadd.f32 %v504, %v612
    %614 = vmatmul.f32.gmra.mxu0 %v485
    %v615 = vpop.f32.mrf.mxu0
    %v616 = vadd.f32 %v504, %v615
    %617 = vdwg.mxu0
    %vm618 = vcmask 23552
    %619 = vst.msk [vmem:[%s3] sm:$0xff] %vm618, %v523
    %620 = vst.msk [vmem:[%s3 + $0x8] sm:$0xff] %vm618, %v526
    %621 = vst.msk [vmem:[%s3 + $0x10] sm:$0xff] %vm618, %v529
    %622 = vst.msk [vmem:[%s3 + $0x18] sm:$0xff] %vm618, %v532
    %623 = vst.msk [vmem:[%s3 + $0x20] sm:$0xff] %vm618, %v535
    %624 = vst.msk [vmem:[%s3 + $0x28] sm:$0xff] %vm618, %v538
    %625 = vst.msk [vmem:[%s3 + $0x30] sm:$0xff] %vm618, %v541
    %626 = vst.msk [vmem:[%s3 + $0x38] sm:$0xff] %vm618, %v544
    %627 = vst.msk [vmem:[%s3 + $0x40] sm:$0xff] %vm618, %v547
    %628 = vst.msk [vmem:[%s3 + $0x48] sm:$0xff] %vm618, %v550
    %629 = vst.msk [vmem:[%s3 + $0x50] sm:$0xff] %vm618, %v553
    %630 = vst.msk [vmem:[%s3 + $0x58] sm:$0xff] %vm618, %v556
    %631 = vst.msk [vmem:[%s3 + $0x60] sm:$0xff] %vm618, %v559
    %632 = vst.msk [vmem:[%s3 + $0x68] sm:$0xff] %vm618, %v562
    %633 = vst.msk [vmem:[%s3 + $0x70] sm:$0xff] %vm618, %v565
    %634 = vst.msk [vmem:[%s3 + $0x78] sm:$0xff] %vm618, %v568
    %635 = vst.msk [vmem:[%s3 + $0x80] sm:$0xff] %vm618, %v571
    %636 = vst.msk [vmem:[%s3 + $0x88] sm:$0xff] %vm618, %v574
    %637 = vst.msk [vmem:[%s3 + $0x90] sm:$0xff] %vm618, %v577
    %638 = vst.msk [vmem:[%s3 + $0x98] sm:$0xff] %vm618, %v580
    %639 = vst.msk [vmem:[%s3 + $0xa0] sm:$0xff] %vm618, %v583
    %640 = vst.msk [vmem:[%s3 + $0xa8] sm:$0xff] %vm618, %v586
    %641 = vst.msk [vmem:[%s3 + $0xb0] sm:$0xff] %vm618, %v589
    %642 = vst.msk [vmem:[%s3 + $0xb8] sm:$0xff] %vm618, %v592
    %643 = vst.msk [vmem:[%s3 + $0xc0] sm:$0xff] %vm618, %v595
    %644 = vst.msk [vmem:[%s3 + $0xc8] sm:$0xff] %vm618, %v598
    %645 = vst.msk [vmem:[%s3 + $0xd0] sm:$0xff] %vm618, %v601
    %646 = vst.msk [vmem:[%s3 + $0xd8] sm:$0xff] %vm618, %v604
    %647 = vst.msk [vmem:[%s3 + $0xe0] sm:$0xff] %vm618, %v607
    %648 = vst.msk [vmem:[%s3 + $0xe8] sm:$0xff] %vm618, %v610
    %649 = vst.msk [vmem:[%s3 + $0xf0] sm:$0xff] %vm618, %v613
    %650 = vst.msk [vmem:[%s3 + $0xf8] sm:$0xff] %vm618, %v616
    // Predicated region
    $region18: #{winenet_forward.1} parent=1 // pred_check
      _
    $region19: #{winenet_forward.1} parent=1 // pred_check_branch
      %652 = sbr.rel (0) target = $region21
    $region20: #{winenet_forward.1} parent=1 // pred_region
      _
    $region21: #{winenet_forward.1} parent=1 // pred_fallthru
      _
    // Predicated region
    $region22: #{winenet_forward.1} parent=1 // pred_check
      _
    $region23: #{winenet_forward.1} parent=1 // pred_check_branch
      %654 = sbr.rel (0) target = $region25
    $region24: #{winenet_forward.1} parent=1 // pred_region
      _
    $region25: #{winenet_forward.1} parent=1 // pred_fallthru
      _
    %655 = vsyncpa [#allocation4], 1

</llo_original>
